<compile_context>
chip_gen: v7x
topology: tpu7x:2x2x1
jax: 0.10.0
libtpu: 0.0.40
codegen_flags: <defaults>
</compile_context>

<pallas_src>
from functools import partial

import numpy as np
import jax
import jax.numpy as jnp
from jax.experimental import pallas as pl
from jax.experimental.pallas import tpu as pltpu

T = 10
V_TH = 0.5         # LIF threshold; tau = 2 -> charge is h = 0.5 * (v + y)
BN_EPS = 1e-5
SUBLANE = 8


# ----------------------------------------------------------------------------
# Build-time glue: conv1d -> structured matmul weight, with BN folded in.
# ----------------------------------------------------------------------------
def conv1d_to_matrix(w, n_in, stride, padding):
    """w: (C_out, C_in, K) -> M: (C_in*n_in, C_out*n_out), channel-major layout."""
    w = np.asarray(w, dtype=np.float32)
    c_out, c_in, k = w.shape
    n_out = (n_in + 2 * padding - k) // stride + 1
    mat = np.zeros((c_in * n_in, c_out * n_out), dtype=np.float32)
    for co in range(c_out):
        for ci in range(c_in):
            for j in range(n_out):
                for kk in range(k):
                    p = j * stride + kk - padding
                    if 0 <= p < n_in:
                        mat[ci * n_in + p, co * n_out + j] = w[co, ci, kk]
    return mat, n_out


def fold_conv_bn(w, conv_bias, gamma, beta, mean, var, n_in, stride, padding):
    """Fold inference-mode BN into the conv matrix: y = x @ W' + b."""
    mat, n_out = conv1d_to_matrix(w, n_in, stride, padding)
    gamma = np.asarray(gamma, np.float32)
    beta = np.asarray(beta, np.float32)
    mean = np.asarray(mean, np.float32)
    var = np.asarray(var, np.float32)
    conv_bias = np.asarray(conv_bias, np.float32)

    scale_c = gamma / np.sqrt(var + BN_EPS)                     # (C_out,)
    bias_c = (conv_bias - mean) * scale_c + beta                # (C_out,)
    scale = np.repeat(scale_c, n_out)                           # (C_out*n_out,)
    bias = np.repeat(bias_c, n_out)[None, :]                    # (1, C_out*n_out)
    w_folded = (mat * scale[None, :]).astype(np.float32)
    return w_folded, bias.astype(np.float32), n_out


# ----------------------------------------------------------------------------
# Pallas kernel: single invocation, everything resident in VMEM.
# ----------------------------------------------------------------------------
def dsconv2_kernel(n_t, n_bp, x_ref, w1_ref, b1_ref, w2_ref, b2_ref, o_ref):
    d_mid = w1_ref.shape[1]                                      # 8 * N2
    d_out = w2_ref.shape[1]                                      # 4 * N3

    # --- Phase 1: conv1 + folded BN for ALL timesteps: one MXU matmul. -------
    # bf16 operands (spikes/weights round-trip exactly or with ~1e-3 rounding;
    # see note in wrapper), f32 accumulation and bias.
    y1_all = jnp.dot(x_ref[...].astype(jnp.bfloat16), w1_ref[...],
                     preferred_element_type=jnp.float32) + b1_ref[...]

    # --- Phase 2: LIF1 recurrence (the only truly serial part, pure VPU). ----
    # Batch is padded to 8 rows, so each per-step slice starts on a sublane
    # tile boundary: whole-vreg selection, no shuffles, no masked stores.
    v1 = jnp.zeros((n_bp, d_mid), jnp.float32)
    spk_rows = []
    for t in range(n_t):
        h1 = 0.5 * (v1 + y1_all[t * n_bp:(t + 1) * n_bp, :])    # charge (tau=2)
        fire1 = h1 >= V_TH
        spk_rows.append(jnp.where(fire1, 1.0, 0.0))             # exact 0/1
        v1 = jnp.where(fire1, 0.0, h1)                          # hard reset to 0

    # Assemble the conv2 operand once: (T*Bp, d_mid), cast to bf16 once.
    spk_all = jnp.concatenate(spk_rows, axis=0).astype(jnp.bfloat16)

    # --- Phase 3: conv2 + folded BN for ALL timesteps: one MXU matmul. -------
    # w2 is read here, at its single use point (not pinned across the loop).
    y2_all = jnp.dot(spk_all, w2_ref[...],
                     preferred_element_type=jnp.float32) + b2_ref[...]

    # --- Phase 4: LIF2 recurrence + ONE consolidated output store. -----------
    v2 = jnp.zeros((n_bp, d_out), jnp.float32)
    out_rows = []
    for t in range(n_t):
        h2 = 0.5 * (v2 + y2_all[t * n_bp:(t + 1) * n_bp, :])
        fire2 = h2 >= V_TH
        out_rows.append(jnp.where(fire2, 1.0, 0.0))
        v2 = jnp.where(fire2, 0.0, h2)

    o_ref[...] = jnp.concatenate(out_rows, axis=0)               # single store


def dsconv2_forward(x, params):
    """x: (T, B, 2, N1) float32 -> (T, B, 4*N3) float32 (matches torch output)."""
    t_, b_, c_in, n1 = x.shape
    w1m, b1 = params["w1m"], params["b1"]
    w2m, b2 = params["w2m"], params["b2"]
    d_in = c_in * n1
    d_mid = w1m.shape[1]     # 8 * N2
    d_out = w2m.shape[1]     # 4 * N3

    # Pad the batch to the 8-sublane tile so every per-timestep row block in
    # the kernel is tile-aligned; pad rows are sliced away after the call.
    b_pad = ((b_ + SUBLANE - 1) // SUBLANE) * SUBLANE
    if b_pad != b_:
        x = jnp.pad(x, ((0, 0), (0, b_pad - b_), (0, 0), (0, 0)))

    # Channel-major flatten (pure reshape of the torch layout) and fold T into
    # the row dimension so each conv is a single matmul.
    x_flat = x.reshape(t_ * b_pad, d_in)

    vmem_specs = [pl.BlockSpec(memory_space=pltpu.MemorySpace.VMEM)
                  for _ in range(5)]
    out_spec = pl.BlockSpec(memory_space=pltpu.MemorySpace.VMEM)

    flops = 2 * t_ * b_pad * (d_in * d_mid + d_mid * d_out)
    bytes_accessed = (x_flat.size * 4 + w1m.size * 2 + w2m.size * 2
                      + b1.size * 4 + b2.size * 4 + t_ * b_pad * d_out * 4)

    out = pl.pallas_call(
        partial(dsconv2_kernel, t_, b_pad),
        out_shape=jax.ShapeDtypeStruct((t_ * b_pad, d_out), jnp.float32),
        in_specs=vmem_specs,
        out_specs=out_spec,
        cost_estimate=pl.CostEstimate(flops=flops, transcendentals=0,
                                      bytes_accessed=bytes_accessed),
    )(x_flat, w1m, b1, w2m, b2)

    return out.reshape(t_, b_pad, d_out)[:, :b_, :]


def build_params(n1, key):
    ks = jax.random.split(key, 10)
    # Conv1d(2, 8, k=7, s=3, p=3) + BatchNorm1d(8)
    w1 = 0.3 * jax.random.normal(ks[0], (8, 2, 7), jnp.float32)
    cb1 = 0.1 * jax.random.normal(ks[1], (8,), jnp.float32)
    g1 = 1.0 + 0.1 * jax.random.normal(ks[2], (8,), jnp.float32)
    be1 = 0.1 * jax.random.normal(ks[3], (8,), jnp.float32)
    m1 = 0.1 * jax.random.normal(ks[4], (8,), jnp.float32)
    v1 = 1.0 + 0.1 * jnp.abs(jax.random.normal(ks[5], (8,), jnp.float32))
    # Conv1d(8, 4, k=5, s=2, p=2) + BatchNorm1d(4)
    w2 = 0.3 * jax.random.normal(ks[6], (4, 8, 5), jnp.float32)
    cb2 = 0.1 * jax.random.normal(ks[7], (4,), jnp.float32)
    g2 = 1.0 + 0.1 * jax.random.normal(ks[8], (4,), jnp.float32)
    be2 = 0.1 * jax.random.normal(ks[9], (4,), jnp.float32)
    m2 = np.zeros((4,), np.float32)
    v2 = np.ones((4,), np.float32)

    w1f, b1, n2 = fold_conv_bn(np.asarray(w1), cb1, g1, be1, m1,
                               np.asarray(v1), n_in=n1, stride=3, padding=3)
    w2f, b2, n3 = fold_conv_bn(np.asarray(w2), cb2, g2, be2, m2, v2,
                               n_in=n2, stride=2, padding=2)

    params = {
        # bf16 weights for the MXU. Spikes (0/1) are exact in bf16; the conv
        # weights/inputs see ~1e-3 relative rounding, which can flip an
        # individual spike that sits exactly at threshold vs. an f32 torch
        # reference (acceptable for this SNN; keep an f32 path if exact
        # spike-level agreement is required).
        "w1m": jnp.asarray(w1f, jnp.bfloat16),
        "b1": jnp.asarray(b1, jnp.float32),
        "w2m": jnp.asarray(w2f, jnp.bfloat16),
        "b2": jnp.asarray(b2, jnp.float32),
    }
    return params, n2, n3


if __name__ == "__main__":
    B, C_IN, N1 = 2, 2, 96   # -> N2 = 32 (d_mid = 256), N3 = 16 (d_out = 64)
    key = jax.random.PRNGKey(0)
    kx, kp = jax.random.split(key)
    x = jax.random.normal(kx, (T, B, C_IN, N1), jnp.float32)

    params, n2, n3 = build_params(N1, kp)
    out = dsconv2_forward(x, params)
    out = jax.block_until_ready(out)

    assert out.shape == (T, B, 4 * n3), out.shape
    assert bool(jnp.all(jnp.isfinite(out)))
    # Spiking output must be exactly {0, 1}.
    assert bool(jnp.all((out == 0.0) | (out == 1.0)))
    print("KERNEL_OK")
</pallas_src>

<mosaic_0001>
module attributes {stable_mosaic.version = 11 : i64} {
  func.func @dsconv2_kernel(%arg0: memref<80x192xf32, #tpu.memory_space<vmem>>, %arg1: memref<192x256xbf16, #tpu.memory_space<vmem>>, %arg2: memref<1x256xf32, #tpu.memory_space<vmem>>, %arg3: memref<256x64xbf16, #tpu.memory_space<vmem>>, %arg4: memref<1x64xf32, #tpu.memory_space<vmem>>, %arg5: memref<80x64xf32, #tpu.memory_space<vmem>>) attributes {dimension_semantics = [], scalar_prefetch = 0 : i64, scratch_operands = 0 : i64, tpu.core_type = #tpu.core_type<tc>} {
    %c0 = arith.constant 0 : index
    %c0_0 = arith.constant 0 : index
    %0 = vector.load %arg0[%c0, %c0_0] : memref<80x192xf32, #tpu.memory_space<vmem>>, vector<80x192xf32>
    %1 = arith.truncf %0 : vector<80x192xf32> to vector<80x192xbf16>
    %c0_1 = arith.constant 0 : index
    %c0_2 = arith.constant 0 : index
    %2 = vector.load %arg1[%c0_1, %c0_2] : memref<192x256xbf16, #tpu.memory_space<vmem>>, vector<192x256xbf16>
    %cst = arith.constant dense<0.000000e+00> : vector<80x256xf32>
    %3 = tpu.matmul %1, %2, %cst {dimension_numbers = #tpu.dot_dimension_numbers<[1], [0], [0], [1], [0, 0, 1, 1], [], []>} : vector<80x192xbf16>, vector<192x256xbf16>, vector<80x256xf32> -> vector<80x256xf32>
    %c0_3 = arith.constant 0 : index
    %c0_4 = arith.constant 0 : index
    %4 = vector.load %arg2[%c0_3, %c0_4] : memref<1x256xf32, #tpu.memory_space<vmem>>, vector<1x256xf32>
    %5 = vector.broadcast %4 : vector<1x256xf32> to vector<80x256xf32>
    %6 = arith.addf %3, %5 : vector<80x256xf32>
    %cst_5 = arith.constant 0.000000e+00 : f32
    %7 = vector.broadcast %cst_5 : f32 to vector<8x256xf32>
    %8 = vector.extract_strided_slice %6 {offsets = [0, 0], sizes = [8, 256], strides = [1, 1]} : vector<80x256xf32> to vector<8x256xf32>
    %9 = arith.addf %7, %8 : vector<8x256xf32>
    %cst_6 = arith.constant 5.000000e-01 : f32
    %10 = vector.broadcast %cst_6 : f32 to vector<8x256xf32>
    %11 = arith.mulf %10, %9 : vector<8x256xf32>
    %cst_7 = arith.constant 5.000000e-01 : f32
    %12 = vector.broadcast %cst_7 : f32 to vector<8x256xf32>
    %13 = arith.cmpf oge, %11, %12 : vector<8x256xf32>
    %cst_8 = arith.constant 1.000000e+00 : f32
    %cst_9 = arith.constant 0.000000e+00 : f32
    %14 = vector.broadcast %cst_8 : f32 to vector<8x256xf32>
    %15 = vector.broadcast %cst_9 : f32 to vector<8x256xf32>
    %16 = arith.select %13, %14, %15 : vector<8x256xi1>, vector<8x256xf32>
    %cst_10 = arith.constant 0.000000e+00 : f32
    %17 = vector.broadcast %cst_10 : f32 to vector<8x256xf32>
    %18 = arith.select %13, %17, %11 : vector<8x256xi1>, vector<8x256xf32>
    %19 = vector.extract_strided_slice %6 {offsets = [8, 0], sizes = [8, 256], strides = [1, 1]} : vector<80x256xf32> to vector<8x256xf32>
    %20 = arith.addf %18, %19 : vector<8x256xf32>
    %cst_11 = arith.constant 5.000000e-01 : f32
    %21 = vector.broadcast %cst_11 : f32 to vector<8x256xf32>
    %22 = arith.mulf %21, %20 : vector<8x256xf32>
    %cst_12 = arith.constant 5.000000e-01 : f32
    %23 = vector.broadcast %cst_12 : f32 to vector<8x256xf32>
    %24 = arith.cmpf oge, %22, %23 : vector<8x256xf32>
    %cst_13 = arith.constant 1.000000e+00 : f32
    %cst_14 = arith.constant 0.000000e+00 : f32
    %25 = vector.broadcast %cst_13 : f32 to vector<8x256xf32>
    %26 = vector.broadcast %cst_14 : f32 to vector<8x256xf32>
    %27 = arith.select %24, %25, %26 : vector<8x256xi1>, vector<8x256xf32>
    %cst_15 = arith.constant 0.000000e+00 : f32
    %28 = vector.broadcast %cst_15 : f32 to vector<8x256xf32>
    %29 = arith.select %24, %28, %22 : vector<8x256xi1>, vector<8x256xf32>
    %30 = vector.extract_strided_slice %6 {offsets = [16, 0], sizes = [8, 256], strides = [1, 1]} : vector<80x256xf32> to vector<8x256xf32>
    %31 = arith.addf %29, %30 : vector<8x256xf32>
    %cst_16 = arith.constant 5.000000e-01 : f32
    %32 = vector.broadcast %cst_16 : f32 to vector<8x256xf32>
    %33 = arith.mulf %32, %31 : vector<8x256xf32>
    %cst_17 = arith.constant 5.000000e-01 : f32
    %34 = vector.broadcast %cst_17 : f32 to vector<8x256xf32>
    %35 = arith.cmpf oge, %33, %34 : vector<8x256xf32>
    %cst_18 = arith.constant 1.000000e+00 : f32
    %cst_19 = arith.constant 0.000000e+00 : f32
    %36 = vector.broadcast %cst_18 : f32 to vector<8x256xf32>
    %37 = vector.broadcast %cst_19 : f32 to vector<8x256xf32>
    %38 = arith.select %35, %36, %37 : vector<8x256xi1>, vector<8x256xf32>
    %cst_20 = arith.constant 0.000000e+00 : f32
    %39 = vector.broadcast %cst_20 : f32 to vector<8x256xf32>
    %40 = arith.select %35, %39, %33 : vector<8x256xi1>, vector<8x256xf32>
    %41 = vector.extract_strided_slice %6 {offsets = [24, 0], sizes = [8, 256], strides = [1, 1]} : vector<80x256xf32> to vector<8x256xf32>
    %42 = arith.addf %40, %41 : vector<8x256xf32>
    %cst_21 = arith.constant 5.000000e-01 : f32
    %43 = vector.broadcast %cst_21 : f32 to vector<8x256xf32>
    %44 = arith.mulf %43, %42 : vector<8x256xf32>
    %cst_22 = arith.constant 5.000000e-01 : f32
    %45 = vector.broadcast %cst_22 : f32 to vector<8x256xf32>
    %46 = arith.cmpf oge, %44, %45 : vector<8x256xf32>
    %cst_23 = arith.constant 1.000000e+00 : f32
    %cst_24 = arith.constant 0.000000e+00 : f32
    %47 = vector.broadcast %cst_23 : f32 to vector<8x256xf32>
    %48 = vector.broadcast %cst_24 : f32 to vector<8x256xf32>
    %49 = arith.select %46, %47, %48 : vector<8x256xi1>, vector<8x256xf32>
    %cst_25 = arith.constant 0.000000e+00 : f32
    %50 = vector.broadcast %cst_25 : f32 to vector<8x256xf32>
    %51 = arith.select %46, %50, %44 : vector<8x256xi1>, vector<8x256xf32>
    %52 = vector.extract_strided_slice %6 {offsets = [32, 0], sizes = [8, 256], strides = [1, 1]} : vector<80x256xf32> to vector<8x256xf32>
    %53 = arith.addf %51, %52 : vector<8x256xf32>
    %cst_26 = arith.constant 5.000000e-01 : f32
    %54 = vector.broadcast %cst_26 : f32 to vector<8x256xf32>
    %55 = arith.mulf %54, %53 : vector<8x256xf32>
    %cst_27 = arith.constant 5.000000e-01 : f32
    %56 = vector.broadcast %cst_27 : f32 to vector<8x256xf32>
    %57 = arith.cmpf oge, %55, %56 : vector<8x256xf32>
    %cst_28 = arith.constant 1.000000e+00 : f32
    %cst_29 = arith.constant 0.000000e+00 : f32
    %58 = vector.broadcast %cst_28 : f32 to vector<8x256xf32>
    %59 = vector.broadcast %cst_29 : f32 to vector<8x256xf32>
    %60 = arith.select %57, %58, %59 : vector<8x256xi1>, vector<8x256xf32>
    %cst_30 = arith.constant 0.000000e+00 : f32
    %61 = vector.broadcast %cst_30 : f32 to vector<8x256xf32>
    %62 = arith.select %57, %61, %55 : vector<8x256xi1>, vector<8x256xf32>
    %63 = vector.extract_strided_slice %6 {offsets = [40, 0], sizes = [8, 256], strides = [1, 1]} : vector<80x256xf32> to vector<8x256xf32>
    %64 = arith.addf %62, %63 : vector<8x256xf32>
    %cst_31 = arith.constant 5.000000e-01 : f32
    %65 = vector.broadcast %cst_31 : f32 to vector<8x256xf32>
    %66 = arith.mulf %65, %64 : vector<8x256xf32>
    %cst_32 = arith.constant 5.000000e-01 : f32
    %67 = vector.broadcast %cst_32 : f32 to vector<8x256xf32>
    %68 = arith.cmpf oge, %66, %67 : vector<8x256xf32>
    %cst_33 = arith.constant 1.000000e+00 : f32
    %cst_34 = arith.constant 0.000000e+00 : f32
    %69 = vector.broadcast %cst_33 : f32 to vector<8x256xf32>
    %70 = vector.broadcast %cst_34 : f32 to vector<8x256xf32>
    %71 = arith.select %68, %69, %70 : vector<8x256xi1>, vector<8x256xf32>
    %cst_35 = arith.constant 0.000000e+00 : f32
    %72 = vector.broadcast %cst_35 : f32 to vector<8x256xf32>
    %73 = arith.select %68, %72, %66 : vector<8x256xi1>, vector<8x256xf32>
    %74 = vector.extract_strided_slice %6 {offsets = [48, 0], sizes = [8, 256], strides = [1, 1]} : vector<80x256xf32> to vector<8x256xf32>
    %75 = arith.addf %73, %74 : vector<8x256xf32>
    %cst_36 = arith.constant 5.000000e-01 : f32
    %76 = vector.broadcast %cst_36 : f32 to vector<8x256xf32>
    %77 = arith.mulf %76, %75 : vector<8x256xf32>
    %cst_37 = arith.constant 5.000000e-01 : f32
    %78 = vector.broadcast %cst_37 : f32 to vector<8x256xf32>
    %79 = arith.cmpf oge, %77, %78 : vector<8x256xf32>
    %cst_38 = arith.constant 1.000000e+00 : f32
    %cst_39 = arith.constant 0.000000e+00 : f32
    %80 = vector.broadcast %cst_38 : f32 to vector<8x256xf32>
    %81 = vector.broadcast %cst_39 : f32 to vector<8x256xf32>
    %82 = arith.select %79, %80, %81 : vector<8x256xi1>, vector<8x256xf32>
    %cst_40 = arith.constant 0.000000e+00 : f32
    %83 = vector.broadcast %cst_40 : f32 to vector<8x256xf32>
    %84 = arith.select %79, %83, %77 : vector<8x256xi1>, vector<8x256xf32>
    %85 = vector.extract_strided_slice %6 {offsets = [56, 0], sizes = [8, 256], strides = [1, 1]} : vector<80x256xf32> to vector<8x256xf32>
    %86 = arith.addf %84, %85 : vector<8x256xf32>
    %cst_41 = arith.constant 5.000000e-01 : f32
    %87 = vector.broadcast %cst_41 : f32 to vector<8x256xf32>
    %88 = arith.mulf %87, %86 : vector<8x256xf32>
    %cst_42 = arith.constant 5.000000e-01 : f32
    %89 = vector.broadcast %cst_42 : f32 to vector<8x256xf32>
    %90 = arith.cmpf oge, %88, %89 : vector<8x256xf32>
    %cst_43 = arith.constant 1.000000e+00 : f32
    %cst_44 = arith.constant 0.000000e+00 : f32
    %91 = vector.broadcast %cst_43 : f32 to vector<8x256xf32>
    %92 = vector.broadcast %cst_44 : f32 to vector<8x256xf32>
    %93 = arith.select %90, %91, %92 : vector<8x256xi1>, vector<8x256xf32>
    %cst_45 = arith.constant 0.000000e+00 : f32
    %94 = vector.broadcast %cst_45 : f32 to vector<8x256xf32>
    %95 = arith.select %90, %94, %88 : vector<8x256xi1>, vector<8x256xf32>
    %96 = vector.extract_strided_slice %6 {offsets = [64, 0], sizes = [8, 256], strides = [1, 1]} : vector<80x256xf32> to vector<8x256xf32>
    %97 = arith.addf %95, %96 : vector<8x256xf32>
    %cst_46 = arith.constant 5.000000e-01 : f32
    %98 = vector.broadcast %cst_46 : f32 to vector<8x256xf32>
    %99 = arith.mulf %98, %97 : vector<8x256xf32>
    %cst_47 = arith.constant 5.000000e-01 : f32
    %100 = vector.broadcast %cst_47 : f32 to vector<8x256xf32>
    %101 = arith.cmpf oge, %99, %100 : vector<8x256xf32>
    %cst_48 = arith.constant 1.000000e+00 : f32
    %cst_49 = arith.constant 0.000000e+00 : f32
    %102 = vector.broadcast %cst_48 : f32 to vector<8x256xf32>
    %103 = vector.broadcast %cst_49 : f32 to vector<8x256xf32>
    %104 = arith.select %101, %102, %103 : vector<8x256xi1>, vector<8x256xf32>
    %cst_50 = arith.constant 0.000000e+00 : f32
    %105 = vector.broadcast %cst_50 : f32 to vector<8x256xf32>
    %106 = arith.select %101, %105, %99 : vector<8x256xi1>, vector<8x256xf32>
    %107 = vector.extract_strided_slice %6 {offsets = [72, 0], sizes = [8, 256], strides = [1, 1]} : vector<80x256xf32> to vector<8x256xf32>
    %108 = arith.addf %106, %107 : vector<8x256xf32>
    %cst_51 = arith.constant 5.000000e-01 : f32
    %109 = vector.broadcast %cst_51 : f32 to vector<8x256xf32>
    %110 = arith.mulf %109, %108 : vector<8x256xf32>
    %cst_52 = arith.constant 5.000000e-01 : f32
    %111 = vector.broadcast %cst_52 : f32 to vector<8x256xf32>
    %112 = arith.cmpf oge, %110, %111 : vector<8x256xf32>
    %cst_53 = arith.constant 1.000000e+00 : f32
    %cst_54 = arith.constant 0.000000e+00 : f32
    %113 = vector.broadcast %cst_53 : f32 to vector<8x256xf32>
    %114 = vector.broadcast %cst_54 : f32 to vector<8x256xf32>
    %115 = arith.select %112, %113, %114 : vector<8x256xi1>, vector<8x256xf32>
    %116 = tpu.concatenate %16, %27, %38, %49, %60, %71, %82, %93, %104, %115 in 0 : vector<8x256xf32>, vector<8x256xf32>, vector<8x256xf32>, vector<8x256xf32>, vector<8x256xf32>, vector<8x256xf32>, vector<8x256xf32>, vector<8x256xf32>, vector<8x256xf32>, vector<8x256xf32> -> vector<80x256xf32>
    %117 = arith.truncf %116 : vector<80x256xf32> to vector<80x256xbf16>
    %c0_55 = arith.constant 0 : index
    %c0_56 = arith.constant 0 : index
    %118 = vector.load %arg3[%c0_55, %c0_56] : memref<256x64xbf16, #tpu.memory_space<vmem>>, vector<256x64xbf16>
    %cst_57 = arith.constant dense<0.000000e+00> : vector<80x64xf32>
    %119 = tpu.matmul %117, %118, %cst_57 {dimension_numbers = #tpu.dot_dimension_numbers<[1], [0], [0], [1], [0, 0, 1, 1], [], []>} : vector<80x256xbf16>, vector<256x64xbf16>, vector<80x64xf32> -> vector<80x64xf32>
    %c0_58 = arith.constant 0 : index
    %c0_59 = arith.constant 0 : index
    %120 = vector.load %arg4[%c0_58, %c0_59] : memref<1x64xf32, #tpu.memory_space<vmem>>, vector<1x64xf32>
    %121 = vector.broadcast %120 : vector<1x64xf32> to vector<80x64xf32>
    %122 = arith.addf %119, %121 : vector<80x64xf32>
    %cst_60 = arith.constant 0.000000e+00 : f32
    %123 = vector.broadcast %cst_60 : f32 to vector<8x64xf32>
    %124 = vector.extract_strided_slice %122 {offsets = [0, 0], sizes = [8, 64], strides = [1, 1]} : vector<80x64xf32> to vector<8x64xf32>
    %125 = arith.addf %123, %124 : vector<8x64xf32>
    %cst_61 = arith.constant 5.000000e-01 : f32
    %126 = vector.broadcast %cst_61 : f32 to vector<8x64xf32>
    %127 = arith.mulf %126, %125 : vector<8x64xf32>
    %cst_62 = arith.constant 5.000000e-01 : f32
    %128 = vector.broadcast %cst_62 : f32 to vector<8x64xf32>
    %129 = arith.cmpf oge, %127, %128 : vector<8x64xf32>
    %cst_63 = arith.constant 1.000000e+00 : f32
    %cst_64 = arith.constant 0.000000e+00 : f32
    %130 = vector.broadcast %cst_63 : f32 to vector<8x64xf32>
    %131 = vector.broadcast %cst_64 : f32 to vector<8x64xf32>
    %132 = arith.select %129, %130, %131 : vector<8x64xi1>, vector<8x64xf32>
    %cst_65 = arith.constant 0.000000e+00 : f32
    %133 = vector.broadcast %cst_65 : f32 to vector<8x64xf32>
    %134 = arith.select %129, %133, %127 : vector<8x64xi1>, vector<8x64xf32>
    %135 = vector.extract_strided_slice %122 {offsets = [8, 0], sizes = [8, 64], strides = [1, 1]} : vector<80x64xf32> to vector<8x64xf32>
    %136 = arith.addf %134, %135 : vector<8x64xf32>
    %cst_66 = arith.constant 5.000000e-01 : f32
    %137 = vector.broadcast %cst_66 : f32 to vector<8x64xf32>
    %138 = arith.mulf %137, %136 : vector<8x64xf32>
    %cst_67 = arith.constant 5.000000e-01 : f32
    %139 = vector.broadcast %cst_67 : f32 to vector<8x64xf32>
    %140 = arith.cmpf oge, %138, %139 : vector<8x64xf32>
    %cst_68 = arith.constant 1.000000e+00 : f32
    %cst_69 = arith.constant 0.000000e+00 : f32
    %141 = vector.broadcast %cst_68 : f32 to vector<8x64xf32>
    %142 = vector.broadcast %cst_69 : f32 to vector<8x64xf32>
    %143 = arith.select %140, %141, %142 : vector<8x64xi1>, vector<8x64xf32>
    %cst_70 = arith.constant 0.000000e+00 : f32
    %144 = vector.broadcast %cst_70 : f32 to vector<8x64xf32>
    %145 = arith.select %140, %144, %138 : vector<8x64xi1>, vector<8x64xf32>
    %146 = vector.extract_strided_slice %122 {offsets = [16, 0], sizes = [8, 64], strides = [1, 1]} : vector<80x64xf32> to vector<8x64xf32>
    %147 = arith.addf %145, %146 : vector<8x64xf32>
    %cst_71 = arith.constant 5.000000e-01 : f32
    %148 = vector.broadcast %cst_71 : f32 to vector<8x64xf32>
    %149 = arith.mulf %148, %147 : vector<8x64xf32>
    %cst_72 = arith.constant 5.000000e-01 : f32
    %150 = vector.broadcast %cst_72 : f32 to vector<8x64xf32>
    %151 = arith.cmpf oge, %149, %150 : vector<8x64xf32>
    %cst_73 = arith.constant 1.000000e+00 : f32
    %cst_74 = arith.constant 0.000000e+00 : f32
    %152 = vector.broadcast %cst_73 : f32 to vector<8x64xf32>
    %153 = vector.broadcast %cst_74 : f32 to vector<8x64xf32>
    %154 = arith.select %151, %152, %153 : vector<8x64xi1>, vector<8x64xf32>
    %cst_75 = arith.constant 0.000000e+00 : f32
    %155 = vector.broadcast %cst_75 : f32 to vector<8x64xf32>
    %156 = arith.select %151, %155, %149 : vector<8x64xi1>, vector<8x64xf32>
    %157 = vector.extract_strided_slice %122 {offsets = [24, 0], sizes = [8, 64], strides = [1, 1]} : vector<80x64xf32> to vector<8x64xf32>
    %158 = arith.addf %156, %157 : vector<8x64xf32>
    %cst_76 = arith.constant 5.000000e-01 : f32
    %159 = vector.broadcast %cst_76 : f32 to vector<8x64xf32>
    %160 = arith.mulf %159, %158 : vector<8x64xf32>
    %cst_77 = arith.constant 5.000000e-01 : f32
    %161 = vector.broadcast %cst_77 : f32 to vector<8x64xf32>
    %162 = arith.cmpf oge, %160, %161 : vector<8x64xf32>
    %cst_78 = arith.constant 1.000000e+00 : f32
    %cst_79 = arith.constant 0.000000e+00 : f32
    %163 = vector.broadcast %cst_78 : f32 to vector<8x64xf32>
    %164 = vector.broadcast %cst_79 : f32 to vector<8x64xf32>
    %165 = arith.select %162, %163, %164 : vector<8x64xi1>, vector<8x64xf32>
    %cst_80 = arith.constant 0.000000e+00 : f32
    %166 = vector.broadcast %cst_80 : f32 to vector<8x64xf32>
    %167 = arith.select %162, %166, %160 : vector<8x64xi1>, vector<8x64xf32>
    %168 = vector.extract_strided_slice %122 {offsets = [32, 0], sizes = [8, 64], strides = [1, 1]} : vector<80x64xf32> to vector<8x64xf32>
    %169 = arith.addf %167, %168 : vector<8x64xf32>
    %cst_81 = arith.constant 5.000000e-01 : f32
    %170 = vector.broadcast %cst_81 : f32 to vector<8x64xf32>
    %171 = arith.mulf %170, %169 : vector<8x64xf32>
    %cst_82 = arith.constant 5.000000e-01 : f32
    %172 = vector.broadcast %cst_82 : f32 to vector<8x64xf32>
    %173 = arith.cmpf oge, %171, %172 : vector<8x64xf32>
    %cst_83 = arith.constant 1.000000e+00 : f32
    %cst_84 = arith.constant 0.000000e+00 : f32
    %174 = vector.broadcast %cst_83 : f32 to vector<8x64xf32>
    %175 = vector.broadcast %cst_84 : f32 to vector<8x64xf32>
    %176 = arith.select %173, %174, %175 : vector<8x64xi1>, vector<8x64xf32>
    %cst_85 = arith.constant 0.000000e+00 : f32
    %177 = vector.broadcast %cst_85 : f32 to vector<8x64xf32>
    %178 = arith.select %173, %177, %171 : vector<8x64xi1>, vector<8x64xf32>
    %179 = vector.extract_strided_slice %122 {offsets = [40, 0], sizes = [8, 64], strides = [1, 1]} : vector<80x64xf32> to vector<8x64xf32>
    %180 = arith.addf %178, %179 : vector<8x64xf32>
    %cst_86 = arith.constant 5.000000e-01 : f32
    %181 = vector.broadcast %cst_86 : f32 to vector<8x64xf32>
    %182 = arith.mulf %181, %180 : vector<8x64xf32>
    %cst_87 = arith.constant 5.000000e-01 : f32
    %183 = vector.broadcast %cst_87 : f32 to vector<8x64xf32>
    %184 = arith.cmpf oge, %182, %183 : vector<8x64xf32>
    %cst_88 = arith.constant 1.000000e+00 : f32
    %cst_89 = arith.constant 0.000000e+00 : f32
    %185 = vector.broadcast %cst_88 : f32 to vector<8x64xf32>
    %186 = vector.broadcast %cst_89 : f32 to vector<8x64xf32>
    %187 = arith.select %184, %185, %186 : vector<8x64xi1>, vector<8x64xf32>
    %cst_90 = arith.constant 0.000000e+00 : f32
    %188 = vector.broadcast %cst_90 : f32 to vector<8x64xf32>
    %189 = arith.select %184, %188, %182 : vector<8x64xi1>, vector<8x64xf32>
    %190 = vector.extract_strided_slice %122 {offsets = [48, 0], sizes = [8, 64], strides = [1, 1]} : vector<80x64xf32> to vector<8x64xf32>
    %191 = arith.addf %189, %190 : vector<8x64xf32>
    %cst_91 = arith.constant 5.000000e-01 : f32
    %192 = vector.broadcast %cst_91 : f32 to vector<8x64xf32>
    %193 = arith.mulf %192, %191 : vector<8x64xf32>
    %cst_92 = arith.constant 5.000000e-01 : f32
    %194 = vector.broadcast %cst_92 : f32 to vector<8x64xf32>
    %195 = arith.cmpf oge, %193, %194 : vector<8x64xf32>
    %cst_93 = arith.constant 1.000000e+00 : f32
    %cst_94 = arith.constant 0.000000e+00 : f32
    %196 = vector.broadcast %cst_93 : f32 to vector<8x64xf32>
    %197 = vector.broadcast %cst_94 : f32 to vector<8x64xf32>
    %198 = arith.select %195, %196, %197 : vector<8x64xi1>, vector<8x64xf32>
    %cst_95 = arith.constant 0.000000e+00 : f32
    %199 = vector.broadcast %cst_95 : f32 to vector<8x64xf32>
    %200 = arith.select %195, %199, %193 : vector<8x64xi1>, vector<8x64xf32>
    %201 = vector.extract_strided_slice %122 {offsets = [56, 0], sizes = [8, 64], strides = [1, 1]} : vector<80x64xf32> to vector<8x64xf32>
    %202 = arith.addf %200, %201 : vector<8x64xf32>
    %cst_96 = arith.constant 5.000000e-01 : f32
    %203 = vector.broadcast %cst_96 : f32 to vector<8x64xf32>
    %204 = arith.mulf %203, %202 : vector<8x64xf32>
    %cst_97 = arith.constant 5.000000e-01 : f32
    %205 = vector.broadcast %cst_97 : f32 to vector<8x64xf32>
    %206 = arith.cmpf oge, %204, %205 : vector<8x64xf32>
    %cst_98 = arith.constant 1.000000e+00 : f32
    %cst_99 = arith.constant 0.000000e+00 : f32
    %207 = vector.broadcast %cst_98 : f32 to vector<8x64xf32>
    %208 = vector.broadcast %cst_99 : f32 to vector<8x64xf32>
    %209 = arith.select %206, %207, %208 : vector<8x64xi1>, vector<8x64xf32>
    %cst_100 = arith.constant 0.000000e+00 : f32
    %210 = vector.broadcast %cst_100 : f32 to vector<8x64xf32>
    %211 = arith.select %206, %210, %204 : vector<8x64xi1>, vector<8x64xf32>
    %212 = vector.extract_strided_slice %122 {offsets = [64, 0], sizes = [8, 64], strides = [1, 1]} : vector<80x64xf32> to vector<8x64xf32>
    %213 = arith.addf %211, %212 : vector<8x64xf32>
    %cst_101 = arith.constant 5.000000e-01 : f32
    %214 = vector.broadcast %cst_101 : f32 to vector<8x64xf32>
    %215 = arith.mulf %214, %213 : vector<8x64xf32>
    %cst_102 = arith.constant 5.000000e-01 : f32
    %216 = vector.broadcast %cst_102 : f32 to vector<8x64xf32>
    %217 = arith.cmpf oge, %215, %216 : vector<8x64xf32>
    %cst_103 = arith.constant 1.000000e+00 : f32
    %cst_104 = arith.constant 0.000000e+00 : f32
    %218 = vector.broadcast %cst_103 : f32 to vector<8x64xf32>
    %219 = vector.broadcast %cst_104 : f32 to vector<8x64xf32>
    %220 = arith.select %217, %218, %219 : vector<8x64xi1>, vector<8x64xf32>
    %cst_105 = arith.constant 0.000000e+00 : f32
    %221 = vector.broadcast %cst_105 : f32 to vector<8x64xf32>
    %222 = arith.select %217, %221, %215 : vector<8x64xi1>, vector<8x64xf32>
    %223 = vector.extract_strided_slice %122 {offsets = [72, 0], sizes = [8, 64], strides = [1, 1]} : vector<80x64xf32> to vector<8x64xf32>
    %224 = arith.addf %222, %223 : vector<8x64xf32>
    %cst_106 = arith.constant 5.000000e-01 : f32
    %225 = vector.broadcast %cst_106 : f32 to vector<8x64xf32>
    %226 = arith.mulf %225, %224 : vector<8x64xf32>
    %cst_107 = arith.constant 5.000000e-01 : f32
    %227 = vector.broadcast %cst_107 : f32 to vector<8x64xf32>
    %228 = arith.cmpf oge, %226, %227 : vector<8x64xf32>
    %cst_108 = arith.constant 1.000000e+00 : f32
    %cst_109 = arith.constant 0.000000e+00 : f32
    %229 = vector.broadcast %cst_108 : f32 to vector<8x64xf32>
    %230 = vector.broadcast %cst_109 : f32 to vector<8x64xf32>
    %231 = arith.select %228, %229, %230 : vector<8x64xi1>, vector<8x64xf32>
    %232 = tpu.concatenate %132, %143, %154, %165, %176, %187, %198, %209, %220, %231 in 0 : vector<8x64xf32>, vector<8x64xf32>, vector<8x64xf32>, vector<8x64xf32>, vector<8x64xf32>, vector<8x64xf32>, vector<8x64xf32>, vector<8x64xf32>, vector<8x64xf32>, vector<8x64xf32> -> vector<80x64xf32>
    %c0_110 = arith.constant 0 : index
    %c0_111 = arith.constant 0 : index
    %233 = vector.load %arg5[%c0_110, %c0_111] : memref<80x64xf32, #tpu.memory_space<vmem>>, vector<80x64xf32>
    tpu.vector_store %arg5[%c0_110, %c0_111], %232 {strides = array<i32>} : memref<80x64xf32, #tpu.memory_space<vmem>>, vector<80x64xf32>,
    return
  }
}

</mosaic_0001>

<llo_original>
// kernel: tpu_custom_call.1
$region0: #{tpu_custom_call.1}
  #allocation0 [shape = 'u32[]', space=smem, size = 0x4, offset = 0x4, fixed_abs, tag = 'smem constant byte address 0x4 - core index']
  #allocation1 [shape = 'u32[144,128]{1,0:T(1,128)}', space=vmem, size = 0x12000, scoped, tag = 'internal scratch']
  %s0 = inlined_call_operand.hbm [shape: f32[80,192], index: 0, kind: input, shape index: {}]
  %s1 = inlined_call_operand.vmem [shape: bf16[192,256], index: 1, kind: input, shape index: {}]
  %s2 = inlined_call_operand.vmem [shape: f32[1,256], index: 2, kind: input, shape index: {}]
  %s3 = inlined_call_operand.vmem [shape: bf16[256,64], index: 3, kind: input, shape index: {}]
  %s4 = inlined_call_operand.vmem [shape: f32[1,64], index: 4, kind: input, shape index: {}]
  %s5 = inlined_call_operand.vmem [shape: f32[80,64], index: 5, kind: output, shape index: {}]
  %s6 = sld [smem:[#allocation0]]
  $region34: #{tpu_custom_call.1} parent=0
    _
  %s8 = ssub.s32 1, %s6
  %s9 = scalar_select 0, %s8, %s6
  $region1: #{tpu_custom_call.1} parent=0
    #allocation2 [shape = 'u8[81920]{0}', space=vmem, size = 0x14000, scoped, tag = 'input window, operand 0, single buffered']
    #allocation3 [shape = 's32[1]{0}', space=sflag, size = 0x4, scoped, tag = 'scoped memory for tpu_custom_call.1']
    %10 = vsyncpa [#allocation3], 0
    // Predicated region
    $region2: #{tpu_custom_call.1} parent=1 // pred_check
      _
    $region3: #{tpu_custom_call.1} parent=1 // pred_check_branch
      %12 = sbr.rel (0) target = $region5
    $region4: #{tpu_custom_call.1} parent=1 // pred_region
      %s14 = ssub.s32 2560, 2560
      %15 = vsyncadd [#allocation3], %s14
      %s16 = sshll.u32 [#allocation2], 4
      %s17 = int_to_ptr.vmem [resolvable:$true] %s16
      %22 = dma.hbm_to_vmem [thread:$0]  %s0, 2560, %s17, [#allocation3], 256, 256, 16
    $region5: #{tpu_custom_call.1} parent=1 // pred_fallthru
      _
    // Predicated region
    $region6: #{tpu_custom_call.1} parent=1 // pred_check
      _
    $region7: #{tpu_custom_call.1} parent=1 // pred_check_branch
      %24 = sbr.rel (0) target = $region9
    $region8: #{tpu_custom_call.1} parent=1 // pred_region
      _
    $region9: #{tpu_custom_call.1} parent=1 // pred_fallthru
      _
    // Predicated region
    $region10: #{tpu_custom_call.1} parent=1 // pred_check
      _
    $region11: #{tpu_custom_call.1} parent=1 // pred_check_branch
      %26 = sbr.rel (0) target = $region13
    $region12: #{tpu_custom_call.1} parent=1 // pred_region
      _
    $region13: #{tpu_custom_call.1} parent=1 // pred_fallthru
      _
    // Predicated region
    $region14: #{tpu_custom_call.1} parent=1 // pred_check
      _
    $region15: #{tpu_custom_call.1} parent=1 // pred_check_branch
      %28 = sbr.rel (0) target = $region17
    $region16: #{tpu_custom_call.1} parent=1 // pred_region
      _
    $region17: #{tpu_custom_call.1} parent=1 // pred_fallthru
      _
    // Predicated region
    $region18: #{tpu_custom_call.1} parent=1 // pred_check
      _
    $region19: #{tpu_custom_call.1} parent=1 // pred_check_branch
      %30 = sbr.rel (0) target = $region21
    $region20: #{tpu_custom_call.1} parent=1 // pred_region
      _
    $region21: #{tpu_custom_call.1} parent=1 // pred_fallthru
      _
    // Predicated region
    $region22: #{tpu_custom_call.1} parent=1 // pred_check
      _
    $region23: #{tpu_custom_call.1} parent=1 // pred_check_branch
      %32 = sbr.rel (0) target = $region25
    $region24: #{tpu_custom_call.1} parent=1 // pred_region
      %33 = dma.done [#allocation3], 2560
    $region25: #{tpu_custom_call.1} parent=1 // pred_fallthru
      _
    %v35 = vld [vmem:[#allocation2] sm:$0xff]
    %v36 = vld [vmem:[#allocation2 + $0x8] sm:$0xff]
    %v37 = vld [vmem:[#allocation2 + $0x10] sm:$0xff]
    %v38 = vld [vmem:[#allocation2 + $0x18] sm:$0xff]
    %v39 = vld [vmem:[#allocation2 + $0x20] sm:$0xff]
    %v40 = vld [vmem:[#allocation2 + $0x28] sm:$0xff]
    %v41 = vld [vmem:[#allocation2 + $0x30] sm:$0xff]
    %v42 = vld [vmem:[#allocation2 + $0x38] sm:$0xff]
    %v43 = vld [vmem:[#allocation2 + $0x40] sm:$0xff]
    %v44 = vld [vmem:[#allocation2 + $0x48] sm:$0xff]
    %v45 = vld [vmem:[#allocation2 + $0x50] sm:$0xff]
    %v46 = vld [vmem:[#allocation2 + $0x58] sm:$0xff]
    %v47 = vld [vmem:[#allocation2 + $0x60] sm:$0xff]
    %v48 = vld [vmem:[#allocation2 + $0x68] sm:$0xff]
    %v49 = vld [vmem:[#allocation2 + $0x70] sm:$0xff]
    %v50 = vld [vmem:[#allocation2 + $0x78] sm:$0xff]
    %v51 = vld [vmem:[#allocation2 + $0x80] sm:$0xff]
    %v52 = vld [vmem:[#allocation2 + $0x88] sm:$0xff]
    %v53 = vld [vmem:[#allocation2 + $0x90] sm:$0xff]
    %v54 = vld [vmem:[#allocation2 + $0x98] sm:$0xff]
    %v55 = vpack.c.bf16 %v37, %v35
    %v56 = vpack.c.bf16 %v38, %v36
    %v57 = vpack.c.bf16 %v41, %v39
    %v58 = vpack.c.bf16 %v42, %v40
    %v59 = vpack.c.bf16 %v45, %v43
    %v60 = vpack.c.bf16 %v46, %v44
    %v61 = vpack.c.bf16 %v49, %v47
    %v62 = vpack.c.bf16 %v50, %v48
    %v63 = vpack.c.bf16 %v53, %v51
    %v64 = vpack.c.bf16 %v54, %v52
    %v65 = vld [vmem:[%s1] sm:$0xff]
    %v66 = vld [vmem:[%s1 + $0x8] sm:$0xff]
    %v67 = vld [vmem:[%s1 + $0x10] sm:$0xff]
    %v68 = vld [vmem:[%s1 + $0x18] sm:$0xff]
    %v69 = vld [vmem:[%s1 + $0x20] sm:$0xff]
    %v70 = vld [vmem:[%s1 + $0x28] sm:$0xff]
    %v71 = vld [vmem:[%s1 + $0x30] sm:$0xff]
    %v72 = vld [vmem:[%s1 + $0x38] sm:$0xff]
    %v73 = vld [vmem:[%s1 + $0x40] sm:$0xff]
    %v74 = vld [vmem:[%s1 + $0x48] sm:$0xff]
    %v75 = vld [vmem:[%s1 + $0x50] sm:$0xff]
    %v76 = vld [vmem:[%s1 + $0x58] sm:$0xff]
    %v77 = vld [vmem:[%s1 + $0x60] sm:$0xff]
    %v78 = vld [vmem:[%s1 + $0x68] sm:$0xff]
    %v79 = vld [vmem:[%s1 + $0x70] sm:$0xff]
    %v80 = vld [vmem:[%s1 + $0x78] sm:$0xff]
    %v81 = vld [vmem:[%s1 + $0x80] sm:$0xff]
    %v82 = vld [vmem:[%s1 + $0x88] sm:$0xff]
    %v83 = vld [vmem:[%s1 + $0x90] sm:$0xff]
    %v84 = vld [vmem:[%s1 + $0x98] sm:$0xff]
    %v85 = vld [vmem:[%s1 + $0xa0] sm:$0xff]
    %v86 = vld [vmem:[%s1 + $0xa8] sm:$0xff]
    %v87 = vld [vmem:[%s1 + $0xb0] sm:$0xff]
    %v88 = vld [vmem:[%s1 + $0xb8] sm:$0xff]
    %v89 = vld [vmem:[%s2] sm:$0x3]
    %v91 = vlaneseq
    %v92 = vshrl.u32 %v91, 7
    %v93 = vsub.s32 0, %v92
    %v94 = vrot.slane %v89, %v93
    %v95 = vlaneseq
    %v96 = vshrl.u32 %v95, 7
    %v97 = vsub.s32 1, %v96
    %v98 = vrot.slane %v89, %v97
    %v125 = vunpack.c.l.b16 %v65
    %v126 = vunpack.c.h.b16 %v65
    %v127 = vunpack.c.l.b16 %v66
    %v128 = vunpack.c.h.b16 %v66
    %v129 = vunpack.c.l.b16 %v67
    %v130 = vunpack.c.h.b16 %v67
    %v131 = vunpack.c.l.b16 %v68
    %v132 = vunpack.c.h.b16 %v68
    %v133 = vunpack.c.l.b16 %v69
    %v134 = vunpack.c.h.b16 %v69
    %v135 = vunpack.c.l.b16 %v70
    %v136 = vunpack.c.h.b16 %v70
    %v137 = vunpack.c.l.b16 %v71
    %v138 = vunpack.c.h.b16 %v71
    %v139 = vunpack.c.l.b16 %v72
    %v140 = vunpack.c.h.b16 %v72
    %v141 = vunpack.c.l.b16 %v73
    %v142 = vunpack.c.h.b16 %v73
    %v143 = vunpack.c.l.b16 %v74
    %v144 = vunpack.c.h.b16 %v74
    %v145 = vunpack.c.l.b16 %v75
    %v146 = vunpack.c.h.b16 %v75
    %v147 = vunpack.c.l.b16 %v76
    %v148 = vunpack.c.h.b16 %v76
    %v149 = vunpack.c.l.b16 %v77
    %v150 = vunpack.c.h.b16 %v77
    %v151 = vunpack.c.l.b16 %v78
    %v152 = vunpack.c.h.b16 %v78
    %v153 = vunpack.c.l.b16 %v79
    %v154 = vunpack.c.h.b16 %v79
    %v155 = vunpack.c.l.b16 %v80
    %v156 = vunpack.c.h.b16 %v80
    %v157 = vunpack.c.l.b16 %v81
    %v158 = vunpack.c.h.b16 %v81
    %v159 = vunpack.c.l.b16 %v82
    %v160 = vunpack.c.h.b16 %v82
    %v161 = vunpack.c.l.b16 %v83
    %v162 = vunpack.c.h.b16 %v83
    %v163 = vunpack.c.l.b16 %v84
    %v164 = vunpack.c.h.b16 %v84
    %v165 = vunpack.c.l.b16 %v85
    %v166 = vunpack.c.h.b16 %v85
    %v167 = vunpack.c.l.b16 %v86
    %v168 = vunpack.c.h.b16 %v86
    %v169 = vunpack.c.l.b16 %v87
    %v170 = vunpack.c.h.b16 %v87
    %v171 = vunpack.c.l.b16 %v88
    %v172 = vunpack.c.h.b16 %v88
    %v173 = vpack.c.b16 %v127, %v125
    %v174 = vpack.c.b16 %v128, %v126
    %v175 = vpack.c.b16 %v131, %v129
    %v176 = vpack.c.b16 %v132, %v130
    %v177 = vpack.c.b16 %v135, %v133
    %v178 = vpack.c.b16 %v136, %v134
    %v179 = vpack.c.b16 %v139, %v137
    %v180 = vpack.c.b16 %v140, %v138
    %v181 = vpack.c.b16 %v143, %v141
    %v182 = vpack.c.b16 %v144, %v142
    %v183 = vpack.c.b16 %v147, %v145
    %v184 = vpack.c.b16 %v148, %v146
    %v185 = vpack.c.b16 %v151, %v149
    %v186 = vpack.c.b16 %v152, %v150
    %v187 = vpack.c.b16 %v155, %v153
    %v188 = vpack.c.b16 %v156, %v154
    %v189 = vpack.c.b16 %v159, %v157
    %v190 = vpack.c.b16 %v160, %v158
    %v191 = vpack.c.b16 %v163, %v161
    %v192 = vpack.c.b16 %v164, %v162
    %v193 = vpack.c.b16 %v167, %v165
    %v194 = vpack.c.b16 %v168, %v166
    %v195 = vpack.c.b16 %v171, %v169
    %v196 = vpack.c.b16 %v172, %v170
    %vm221 = vcmask 523264
    %v223 = vsel %vm221, %v56, 0
    %v226 = vsel %vm221, %v58, 0
    %v229 = vsel %vm221, %v60, 0
    %v232 = vsel %vm221, %v62, 0
    %v235 = vsel %vm221, %v64, 0
    %237 = vmatprep.subr.bf16.mxu0 %v174
    %238 = vmatpush1.bf16.msra.mxu0 %v173
    %239 = vmatprep.subr.bf16.mxu0 %v176
    %240 = vmatpush1.bf16.msra.mxu0 %v175
    %241 = vmatprep.subr.bf16.mxu0 %v178
    %242 = vmatpush1.bf16.msra.mxu0 %v177
    %243 = vmatprep.subr.bf16.mxu0 %v180
    %244 = vmatpush1.bf16.msra.mxu0 %v179
    %245 = vmatprep.subr.bf16.mxu0 %v182
    %246 = vmatpush1.bf16.msra.mxu0 %v181
    %247 = vmatprep.subr.bf16.mxu0 %v184
    %248 = vmatpush1.bf16.msra.mxu0 %v183
    %249 = vmatprep.subr.bf16.mxu0 %v186
    %250 = vmatpush1.bf16.msra.mxu0 %v185
    %251 = vmatprep.subr.bf16.mxu0 %v188
    %252 = vmatpush1.bf16.msra.mxu0 %v187
    %253 = vmatprep.subr.bf16.mxu0 %v190
    %254 = vmatpush1.bf16.msra.mxu0 %v189
    %255 = vmatprep.subr.bf16.mxu0 %v192
    %256 = vmatpush1.bf16.msra.mxu0 %v191
    %257 = vmatprep.subr.bf16.mxu0 %v194
    %258 = vmatpush1.bf16.msra.mxu0 %v193
    %259 = vmatprep.subr.bf16.mxu0 %v196
    %260 = vmatpush1.bf16.msra.mxu0 %v195
    %261 = vmatprep.subr.bf16.mxu0 0
    %262 = vmatpush1.bf16.msra.mxu0 0
    %263 = vmatprep.subr.bf16.mxu0 0
    %264 = vmatpush1.bf16.msra.mxu0 0
    %265 = vmatprep.subr.bf16.mxu0 0
    %266 = vmatpush1.bf16.msra.mxu0 0
    %267 = vmatprep.subr.bf16.mxu0 0
    %268 = vmatpush1.bf16.msra.mxu0 0
    %269 = vmatprep.mubr.bf16.mxu0 %v223
    %270 = vmatmul.mubr.bf16.gmra.mrb[0].mxu0 %v55
    %v271 = vpop.f32.mrb[0].mxu0
    %v272 = vadd.f32 %v94, %v271
    %v273 = vpop.f32.mrb[0].mxu0
    %v274 = vadd.f32 %v98, %v273
    %v275 = vpop.f32.mrb[0].mxu0
    %v276 = vadd.f32 %v94, %v275
    %v277 = vpop.f32.mrb[0].mxu0
    %v278 = vadd.f32 %v98, %v277
    %279 = vmatprep.mubr.bf16.mxu0 %v226
    %280 = vmatmul.mubr.bf16.gmra.mrb[0].mxu0 %v57
    %v281 = vpop.f32.mrb[0].mxu0
    %v282 = vadd.f32 %v94, %v281
    %v283 = vpop.f32.mrb[0].mxu0
    %v284 = vadd.f32 %v98, %v283
    %v285 = vpop.f32.mrb[0].mxu0
    %v286 = vadd.f32 %v94, %v285
    %v287 = vpop.f32.mrb[0].mxu0
    %v288 = vadd.f32 %v98, %v287
    %289 = vmatprep.mubr.bf16.mxu0 %v229
    %290 = vmatmul.mubr.bf16.gmra.mrb[0].mxu0 %v59
    %v291 = vpop.f32.mrb[0].mxu0
    %v292 = vadd.f32 %v94, %v291
    %v293 = vpop.f32.mrb[0].mxu0
    %v294 = vadd.f32 %v98, %v293
    %v295 = vpop.f32.mrb[0].mxu0
    %v296 = vadd.f32 %v94, %v295
    %v297 = vpop.f32.mrb[0].mxu0
    %v298 = vadd.f32 %v98, %v297
    %299 = vmatprep.mubr.bf16.mxu0 %v232
    %300 = vmatmul.mubr.bf16.gmra.mrb[0].mxu0 %v61
    %v301 = vpop.f32.mrb[0].mxu0
    %v302 = vadd.f32 %v94, %v301
    %v303 = vpop.f32.mrb[0].mxu0
    %v304 = vadd.f32 %v98, %v303
    %v305 = vpop.f32.mrb[0].mxu0
    %v306 = vadd.f32 %v94, %v305
    %v307 = vpop.f32.mrb[0].mxu0
    %v308 = vadd.f32 %v98, %v307
    %309 = vmatprep.mubr.bf16.mxu0 %v235
    %310 = vmatmul.mubr.bf16.gmra.mrb[0].mxu0 %v63
    %v311 = vpop.f32.mrb[0].mxu0
    %v312 = vadd.f32 %v94, %v311
    %v313 = vpop.f32.mrb[0].mxu0
    %v314 = vadd.f32 %v98, %v313
    %v315 = vpop.f32.mrb[0].mxu0
    %v316 = vadd.f32 %v94, %v315
    %v317 = vpop.f32.mrb[0].mxu0
    %v318 = vadd.f32 %v98, %v317
    %319 = vdwg.mxu0
    %v320 = vadd.f32 %v272, 0.0
    %v321 = vadd.f32 %v274, 0.0
    %v322 = vmul.f32 %v320, 0.5
    %v323 = vmul.f32 %v321, 0.5
    %vm324 = vcmp.ge.f32.partialorder %v322, 0.5
    %vm325 = vcmp.ge.f32.partialorder %v323, 0.5
    %v326 = vsel %vm324, 1.0, 0.0
    %v327 = vsel %vm325, 1.0, 0.0
    %v328 = vsel %vm324, 0.0, %v322
    %v329 = vsel %vm325, 0.0, %v323
    %v330 = vadd.f32 %v328, %v276
    %v331 = vadd.f32 %v329, %v278
    %v332 = vmul.f32 %v330, 0.5
    %v333 = vmul.f32 %v331, 0.5
    %vm334 = vcmp.ge.f32.partialorder %v332, 0.5
    %vm335 = vcmp.ge.f32.partialorder %v333, 0.5
    %v336 = vsel %vm334, 1.0, 0.0
    %v337 = vsel %vm335, 1.0, 0.0
    %v338 = vsel %vm334, 0.0, %v332
    %v339 = vsel %vm335, 0.0, %v333
    %v340 = vadd.f32 %v338, %v282
    %v341 = vadd.f32 %v339, %v284
    %v342 = vmul.f32 %v340, 0.5
    %v343 = vmul.f32 %v341, 0.5
    %vm344 = vcmp.ge.f32.partialorder %v342, 0.5
    %vm345 = vcmp.ge.f32.partialorder %v343, 0.5
    %v346 = vsel %vm344, 1.0, 0.0
    %v347 = vsel %vm345, 1.0, 0.0
    %v348 = vsel %vm344, 0.0, %v342
    %v349 = vsel %vm345, 0.0, %v343
    %v350 = vadd.f32 %v348, %v286
    %v351 = vadd.f32 %v349, %v288
    %v352 = vmul.f32 %v350, 0.5
    %v353 = vmul.f32 %v351, 0.5
    %vm354 = vcmp.ge.f32.partialorder %v352, 0.5
    %vm355 = vcmp.ge.f32.partialorder %v353, 0.5
    %v356 = vsel %vm354, 1.0, 0.0
    %v357 = vsel %vm355, 1.0, 0.0
    %v358 = vsel %vm354, 0.0, %v352
    %v359 = vsel %vm355, 0.0, %v353
    %v360 = vadd.f32 %v358, %v292
    %v361 = vadd.f32 %v359, %v294
    %v362 = vmul.f32 %v360, 0.5
    %v363 = vmul.f32 %v361, 0.5
    %vm364 = vcmp.ge.f32.partialorder %v362, 0.5
    %vm365 = vcmp.ge.f32.partialorder %v363, 0.5
    %v366 = vsel %vm364, 1.0, 0.0
    %v367 = vsel %vm365, 1.0, 0.0
    %v368 = vsel %vm364, 0.0, %v362
    %v369 = vsel %vm365, 0.0, %v363
    %v370 = vadd.f32 %v368, %v296
    %v371 = vadd.f32 %v369, %v298
    %v372 = vmul.f32 %v370, 0.5
    %v373 = vmul.f32 %v371, 0.5
    %vm374 = vcmp.ge.f32.partialorder %v372, 0.5
    %vm375 = vcmp.ge.f32.partialorder %v373, 0.5
    %v376 = vsel %vm374, 1.0, 0.0
    %v377 = vsel %vm375, 1.0, 0.0
    %v378 = vsel %vm374, 0.0, %v372
    %v379 = vsel %vm375, 0.0, %v373
    %v380 = vadd.f32 %v378, %v302
    %v381 = vadd.f32 %v379, %v304
    %v382 = vmul.f32 %v380, 0.5
    %v383 = vmul.f32 %v381, 0.5
    %vm384 = vcmp.ge.f32.partialorder %v382, 0.5
    %vm385 = vcmp.ge.f32.partialorder %v383, 0.5
    %v386 = vsel %vm384, 1.0, 0.0
    %v387 = vsel %vm385, 1.0, 0.0
    %v388 = vsel %vm384, 0.0, %v382
    %v389 = vsel %vm385, 0.0, %v383
    %v390 = vadd.f32 %v388, %v306
    %v391 = vadd.f32 %v389, %v308
    %v392 = vmul.f32 %v390, 0.5
    %v393 = vmul.f32 %v391, 0.5
    %vm394 = vcmp.ge.f32.partialorder %v392, 0.5
    %vm395 = vcmp.ge.f32.partialorder %v393, 0.5
    %v396 = vsel %vm394, 1.0, 0.0
    %v397 = vsel %vm395, 1.0, 0.0
    %v398 = vsel %vm394, 0.0, %v392
    %v399 = vsel %vm395, 0.0, %v393
    %v400 = vadd.f32 %v398, %v312
    %v401 = vadd.f32 %v399, %v314
    %v402 = vmul.f32 %v400, 0.5
    %v403 = vmul.f32 %v401, 0.5
    %vm404 = vcmp.ge.f32.partialorder %v402, 0.5
    %vm405 = vcmp.ge.f32.partialorder %v403, 0.5
    %v406 = vsel %vm404, 1.0, 0.0
    %v407 = vsel %vm405, 1.0, 0.0
    %v408 = vsel %vm404, 0.0, %v402
    %v409 = vsel %vm405, 0.0, %v403
    %v410 = vadd.f32 %v408, %v316
    %v411 = vadd.f32 %v409, %v318
    %v412 = vmul.f32 %v410, 0.5
    %v413 = vmul.f32 %v411, 0.5
    %vm414 = vcmp.ge.f32.partialorder %v412, 0.5
    %vm415 = vcmp.ge.f32.partialorder %v413, 0.5
    %v416 = vsel %vm414, 1.0, 0.0
    %v417 = vsel %vm415, 1.0, 0.0
    %v418 = vpack.c.bf16 %v336, %v326
    %v419 = vpack.c.bf16 %v337, %v327
    %v420 = vpack.c.bf16 %v356, %v346
    %v421 = vpack.c.bf16 %v357, %v347
    %v422 = vpack.c.bf16 %v376, %v366
    %v423 = vpack.c.bf16 %v377, %v367
    %v424 = vpack.c.bf16 %v396, %v386
    %v425 = vpack.c.bf16 %v397, %v387
    %v426 = vpack.c.bf16 %v416, %v406
    %v427 = vpack.c.bf16 %v417, %v407
    %v428 = vld [vmem:[%s3] sm:$0xf]
    %v429 = vld [vmem:[%s3 + $0x4] sm:$0xf]
    %v430 = vld [vmem:[%s3 + $0x8] sm:$0xf]
    %v431 = vld [vmem:[%s3 + $0xc] sm:$0xf]
    %v432 = vld [vmem:[%s3 + $0x10] sm:$0xf]
    %v433 = vld [vmem:[%s3 + $0x14] sm:$0xf]
    %v434 = vld [vmem:[%s3 + $0x18] sm:$0xf]
    %v435 = vld [vmem:[%s3 + $0x1c] sm:$0xf]
    %v436 = vld [vmem:[%s3 + $0x20] sm:$0xf]
    %v437 = vld [vmem:[%s3 + $0x24] sm:$0xf]
    %v438 = vld [vmem:[%s3 + $0x28] sm:$0xf]
    %v439 = vld [vmem:[%s3 + $0x2c] sm:$0xf]
    %v440 = vld [vmem:[%s3 + $0x30] sm:$0xf]
    %v441 = vld [vmem:[%s3 + $0x34] sm:$0xf]
    %v442 = vld [vmem:[%s3 + $0x38] sm:$0xf]
    %v443 = vld [vmem:[%s3 + $0x3c] sm:$0xf]
    %v444 = vld [vmem:[%s3 + $0x40] sm:$0xf]
    %v445 = vld [vmem:[%s3 + $0x44] sm:$0xf]
    %v446 = vld [vmem:[%s3 + $0x48] sm:$0xf]
    %v447 = vld [vmem:[%s3 + $0x4c] sm:$0xf]
    %v448 = vld [vmem:[%s3 + $0x50] sm:$0xf]
    %v449 = vld [vmem:[%s3 + $0x54] sm:$0xf]
    %v450 = vld [vmem:[%s3 + $0x58] sm:$0xf]
    %v451 = vld [vmem:[%s3 + $0x5c] sm:$0xf]
    %v452 = vld [vmem:[%s3 + $0x60] sm:$0xf]
    %v453 = vld [vmem:[%s3 + $0x64] sm:$0xf]
    %v454 = vld [vmem:[%s3 + $0x68] sm:$0xf]
    %v455 = vld [vmem:[%s3 + $0x6c] sm:$0xf]
    %v456 = vld [vmem:[%s3 + $0x70] sm:$0xf]
    %v457 = vld [vmem:[%s3 + $0x74] sm:$0xf]
    %v458 = vld [vmem:[%s3 + $0x78] sm:$0xf]
    %v459 = vld [vmem:[%s3 + $0x7c] sm:$0xf]
    %v460 = vld [vmem:[%s4] sm:$0x1]
    %v462 = vlaneseq
    %v463 = vshrl.u32 %v462, 7
    %v464 = vsub.s32 0, %v463
    %v465 = vrot.slane %v460, %v464
    %v499 = vunpack.c.l.b16 %v428
    %v500 = vunpack.c.l.b16 %v429
    %v501 = vunpack.c.l.b16 %v430
    %v502 = vunpack.c.l.b16 %v431
    %v503 = vunpack.c.l.b16 %v432
    %v504 = vunpack.c.l.b16 %v433
    %v505 = vunpack.c.l.b16 %v434
    %v506 = vunpack.c.l.b16 %v435
    %v507 = vunpack.c.l.b16 %v436
    %v508 = vunpack.c.l.b16 %v437
    %v509 = vunpack.c.l.b16 %v438
    %v510 = vunpack.c.l.b16 %v439
    %v511 = vunpack.c.l.b16 %v440
    %v512 = vunpack.c.l.b16 %v441
    %v513 = vunpack.c.l.b16 %v442
    %v514 = vunpack.c.l.b16 %v443
    %v515 = vunpack.c.l.b16 %v444
    %v516 = vunpack.c.l.b16 %v445
    %v517 = vunpack.c.l.b16 %v446
    %v518 = vunpack.c.l.b16 %v447
    %v519 = vunpack.c.l.b16 %v448
    %v520 = vunpack.c.l.b16 %v449
    %v521 = vunpack.c.l.b16 %v450
    %v522 = vunpack.c.l.b16 %v451
    %v523 = vunpack.c.l.b16 %v452
    %v524 = vunpack.c.l.b16 %v453
    %v525 = vunpack.c.l.b16 %v454
    %v526 = vunpack.c.l.b16 %v455
    %v527 = vunpack.c.l.b16 %v456
    %v528 = vunpack.c.l.b16 %v457
    %v529 = vunpack.c.l.b16 %v458
    %v530 = vunpack.c.l.b16 %v459
    %v531 = vpack.c.b16 %v500, %v499
    %v532 = vpack.c.b16 %v502, %v501
    %v533 = vpack.c.b16 %v504, %v503
    %v534 = vpack.c.b16 %v506, %v505
    %v535 = vpack.c.b16 %v508, %v507
    %v536 = vpack.c.b16 %v510, %v509
    %v537 = vpack.c.b16 %v512, %v511
    %v538 = vpack.c.b16 %v514, %v513
    %v539 = vpack.c.b16 %v516, %v515
    %v540 = vpack.c.b16 %v518, %v517
    %v541 = vpack.c.b16 %v520, %v519
    %v542 = vpack.c.b16 %v522, %v521
    %v543 = vpack.c.b16 %v524, %v523
    %v544 = vpack.c.b16 %v526, %v525
    %v545 = vpack.c.b16 %v528, %v527
    %v546 = vpack.c.b16 %v530, %v529
    %563 = vmatprep.subr.bf16.mxu0 0
    %564 = vmatpush1.bf16.msra.mxu0 %v531
    %565 = vmatprep.subr.bf16.mxu0 0
    %566 = vmatpush1.bf16.msra.mxu0 %v532
    %567 = vmatprep.subr.bf16.mxu0 0
    %568 = vmatpush1.bf16.msra.mxu0 %v533
    %569 = vmatprep.subr.bf16.mxu0 0
    %570 = vmatpush1.bf16.msra.mxu0 %v534
    %571 = vmatprep.subr.bf16.mxu0 0
    %572 = vmatpush1.bf16.msra.mxu0 %v535
    %573 = vmatprep.subr.bf16.mxu0 0
    %574 = vmatpush1.bf16.msra.mxu0 %v536
    %575 = vmatprep.subr.bf16.mxu0 0
    %576 = vmatpush1.bf16.msra.mxu0 %v537
    %577 = vmatprep.subr.bf16.mxu0 0
    %578 = vmatpush1.bf16.msra.mxu0 %v538
    %579 = vmatprep.subr.bf16.mxu0 0
    %580 = vmatpush1.bf16.msra.mxu0 %v539
    %581 = vmatprep.subr.bf16.mxu0 0
    %582 = vmatpush1.bf16.msra.mxu0 %v540
    %583 = vmatprep.subr.bf16.mxu0 0
    %584 = vmatpush1.bf16.msra.mxu0 %v541
    %585 = vmatprep.subr.bf16.mxu0 0
    %586 = vmatpush1.bf16.msra.mxu0 %v542
    %587 = vmatprep.subr.bf16.mxu0 0
    %588 = vmatpush1.bf16.msra.mxu0 %v543
    %589 = vmatprep.subr.bf16.mxu0 0
    %590 = vmatpush1.bf16.msra.mxu0 %v544
    %591 = vmatprep.subr.bf16.mxu0 0
    %592 = vmatpush1.bf16.msra.mxu0 %v545
    %593 = vmatprep.subr.bf16.mxu0 0
    %594 = vmatpush1.bf16.msra.mxu0 %v546
    %595 = vmatprep.mubr.bf16.mxu0 %v419
    %596 = vmatmul.mubr.bf16.gmra.mrb[0].mxu0 %v418
    %v597 = vpop.f32.mrb[0].mxu0
    %v598 = vadd.f32 %v465, %v597
    %v599 = vpop.f32.mrb[0].mxu0
    %v600 = vpop.f32.mrb[0].mxu0
    %v601 = vadd.f32 %v465, %v600
    %v602 = vpop.f32.mrb[0].mxu0
    %603 = vmatprep.mubr.bf16.mxu0 %v421
    %604 = vmatmul.mubr.bf16.gmra.mrb[0].mxu0 %v420
    %v605 = vpop.f32.mrb[0].mxu0
    %v606 = vadd.f32 %v465, %v605
    %v607 = vpop.f32.mrb[0].mxu0
    %v608 = vpop.f32.mrb[0].mxu0
    %v609 = vadd.f32 %v465, %v608
    %v610 = vpop.f32.mrb[0].mxu0
    %611 = vmatprep.mubr.bf16.mxu0 %v423
    %612 = vmatmul.mubr.bf16.gmra.mrb[0].mxu0 %v422
    %v613 = vpop.f32.mrb[0].mxu0
    %v614 = vadd.f32 %v465, %v613
    %v615 = vpop.f32.mrb[0].mxu0
    %v616 = vpop.f32.mrb[0].mxu0
    %v617 = vadd.f32 %v465, %v616
    %v618 = vpop.f32.mrb[0].mxu0
    %619 = vmatprep.mubr.bf16.mxu0 %v425
    %620 = vmatmul.mubr.bf16.gmra.mrb[0].mxu0 %v424
    %v621 = vpop.f32.mrb[0].mxu0
    %v622 = vadd.f32 %v465, %v621
    %v623 = vpop.f32.mrb[0].mxu0
    %v624 = vpop.f32.mrb[0].mxu0
    %v625 = vadd.f32 %v465, %v624
    %v626 = vpop.f32.mrb[0].mxu0
    %627 = vmatprep.mubr.bf16.mxu0 %v427
    %628 = vmatmul.mubr.bf16.gmra.mrb[0].mxu0 %v426
    %v629 = vpop.f32.mrb[0].mxu0
    %v630 = vadd.f32 %v465, %v629
    %v631 = vpop.f32.mrb[0].mxu0
    %v632 = vpop.f32.mrb[0].mxu0
    %v633 = vadd.f32 %v465, %v632
    %v634 = vpop.f32.mrb[0].mxu0
    %635 = vdwg.mxu0
    %v636 = vadd.f32 %v598, 0.0
    %v637 = vmul.f32 %v636, 0.5
    %vm638 = vcmp.ge.f32.partialorder %v637, 0.5
    %v639 = vsel %vm638, 1.0, 0.0
    %v640 = vsel %vm638, 0.0, %v637
    %v641 = vadd.f32 %v640, %v601
    %v642 = vmul.f32 %v641, 0.5
    %vm643 = vcmp.ge.f32.partialorder %v642, 0.5
    %v644 = vsel %vm643, 1.0, 0.0
    %v645 = vsel %vm643, 0.0, %v642
    %v646 = vadd.f32 %v645, %v606
    %v647 = vmul.f32 %v646, 0.5
    %vm648 = vcmp.ge.f32.partialorder %v647, 0.5
    %v649 = vsel %vm648, 1.0, 0.0
    %v650 = vsel %vm648, 0.0, %v647
    %v651 = vadd.f32 %v650, %v609
    %v652 = vmul.f32 %v651, 0.5
    %vm653 = vcmp.ge.f32.partialorder %v652, 0.5
    %v654 = vsel %vm653, 1.0, 0.0
    %v655 = vsel %vm653, 0.0, %v652
    %v656 = vadd.f32 %v655, %v614
    %v657 = vmul.f32 %v656, 0.5
    %vm658 = vcmp.ge.f32.partialorder %v657, 0.5
    %v659 = vsel %vm658, 1.0, 0.0
    %v660 = vsel %vm658, 0.0, %v657
    %v661 = vadd.f32 %v660, %v617
    %v662 = vmul.f32 %v661, 0.5
    %vm663 = vcmp.ge.f32.partialorder %v662, 0.5
    %v664 = vsel %vm663, 1.0, 0.0
    %v665 = vsel %vm663, 0.0, %v662
    %v666 = vadd.f32 %v665, %v622
    %v667 = vmul.f32 %v666, 0.5
    %vm668 = vcmp.ge.f32.partialorder %v667, 0.5
    %v669 = vsel %vm668, 1.0, 0.0
    %v670 = vsel %vm668, 0.0, %v667
    %v671 = vadd.f32 %v670, %v625
    %v672 = vmul.f32 %v671, 0.5
    %vm673 = vcmp.ge.f32.partialorder %v672, 0.5
    %v674 = vsel %vm673, 1.0, 0.0
    %v675 = vsel %vm673, 0.0, %v672
    %v676 = vadd.f32 %v675, %v630
    %v677 = vmul.f32 %v676, 0.5
    %vm678 = vcmp.ge.f32.partialorder %v677, 0.5
    %v679 = vsel %vm678, 1.0, 0.0
    %v680 = vsel %vm678, 0.0, %v677
    %v681 = vadd.f32 %v680, %v633
    %v682 = vmul.f32 %v681, 0.5
    %vm683 = vcmp.ge.f32.partialorder %v682, 0.5
    %v684 = vsel %vm683, 1.0, 0.0
    %685 = vst.msk [vmem:[%s5] sm:$0xff] %vm221, %v639
    %686 = vst.msk [vmem:[%s5 + $0x8] sm:$0xff] %vm221, %v644
    %687 = vst.msk [vmem:[%s5 + $0x10] sm:$0xff] %vm221, %v649
    %688 = vst.msk [vmem:[%s5 + $0x18] sm:$0xff] %vm221, %v654
    %689 = vst.msk [vmem:[%s5 + $0x20] sm:$0xff] %vm221, %v659
    %690 = vst.msk [vmem:[%s5 + $0x28] sm:$0xff] %vm221, %v664
    %691 = vst.msk [vmem:[%s5 + $0x30] sm:$0xff] %vm221, %v669
    %692 = vst.msk [vmem:[%s5 + $0x38] sm:$0xff] %vm221, %v674
    %693 = vst.msk [vmem:[%s5 + $0x40] sm:$0xff] %vm221, %v679
    %694 = vst.msk [vmem:[%s5 + $0x48] sm:$0xff] %vm221, %v684
    // Predicated region
    $region26: #{tpu_custom_call.1} parent=1 // pred_check
      _
    $region27: #{tpu_custom_call.1} parent=1 // pred_check_branch
      %696 = sbr.rel (0) target = $region29
    $region28: #{tpu_custom_call.1} parent=1 // pred_region
      _
    $region29: #{tpu_custom_call.1} parent=1 // pred_fallthru
      _
    // Predicated region
    $region30: #{tpu_custom_call.1} parent=1 // pred_check
      _
    $region31: #{tpu_custom_call.1} parent=1 // pred_check_branch
      %698 = sbr.rel (0) target = $region33
    $region32: #{tpu_custom_call.1} parent=1 // pred_region
      _
    $region33: #{tpu_custom_call.1} parent=1 // pred_fallthru
      _
    %699 = vsyncpa [#allocation3], 1

</llo_original>
